<compile_context>
chip_gen: v7x
topology: tpu7x:2x2x1
jax: 0.10.0
libtpu: 0.0.40
codegen_flags: <defaults>
</compile_context>

<pallas_src>
import functools

import jax
import jax.numpy as jnp
import numpy as np
from jax import lax
from jax.experimental import pallas as pl
from jax.experimental.pallas import tpu as pltpu


# ------------------------------------------------------------------ kernel ---

def _attention_kernel(dec_ref, lis_ref, wphi_ref, bphi_ref, wpsi_ref, bpsi_ref,
                      score_ref, ctx_ref, energy_sc, ctx_sc, *,
                      activate, t_valid, t_chunk):
    """Fused dot-attention for a tile of `bb` batch rows.

    dec_ref   : (bb, Din)      decoder state (single query per batch row)
    lis_ref   : (bb, T, Dl)    listener features (streaming dtype, e.g. bf16)
    wphi_ref  : (Din, Dp) f32, bphi_ref: (1, Dp) f32
    wpsi_ref  : (Dl, Dp) streaming dtype, bpsi_ref: (1, Dp) f32
    score_ref : (bb, T)        softmax attention scores (T is padded to %128)
    ctx_ref   : (bb, Dl)       attention context
    energy_sc : (bb, T)  f32   scratch (energy, then scores)
    ctx_sc    : (bb, Dl) f32   scratch (context accumulator)
    """
    bb, T, Dl = lis_ref.shape
    Dp = wphi_ref.shape[1]
    n_chunks = T // t_chunk
    unroll = n_chunks <= 8

    def act(x):
        if activate == "relu":
            return jnp.maximum(x, 0.0)
        if activate == "tanh":
            return jnp.tanh(x)
        if activate == "sigmoid":
            return jax.nn.sigmoid(x)
        # TODO(synk): other F.<activate> callables are not wired in.
        return x

    # phi(decoder_state): one tiny MXU matmul for the whole batch tile.
    q = act(jnp.dot(dec_ref[...], wphi_ref[...],
                    preferred_element_type=jnp.float32) + bphi_ref[...])  # (bb, Dp)

    wpsi = wpsi_ref[...]          # (Dl, Dp), streaming dtype (MXU-friendly)
    bpsi = bpsi_ref[...]          # (1, Dp) f32

    # ---- pass 1: psi projection + energy, chunked over T (k never fully live)
    def energy_chunk(c, carry):
        t0 = pl.multiple_of(c * t_chunk, t_chunk)
        lis_c = lis_ref[:, pl.ds(t0, t_chunk), :]                      # (bb,tc,Dl)
        k = jnp.dot(lis_c.reshape(bb * t_chunk, Dl), wpsi,
                    preferred_element_type=jnp.float32) + bpsi         # MXU, f32 acc
        k = act(k).reshape(bb, t_chunk, Dp)
        # VPU broadcast-multiply + lane (Dp) reduce: avoids bb M=1 MXU matmuls.
        energy_sc[:, pl.ds(t0, t_chunk)] = jnp.sum(q[:, None, :] * k, axis=-1)
        return carry

    lax.fori_loop(0, n_chunks, energy_chunk, 0, unroll=unroll)

    # ---- masked, numerically stable softmax over T
    energy = energy_sc[...]                                            # (bb, T)
    if t_valid < T:   # static padding mask (padded timesteps get ~zero score)
        t_idx = lax.broadcasted_iota(jnp.int32, (bb, T), 1)
        energy = jnp.where(t_idx < t_valid, energy, -1e30)
    m = jnp.max(energy, axis=-1, keepdims=True)
    e = jnp.exp(energy - m)
    s = e * pl.reciprocal(jnp.sum(e, axis=-1, keepdims=True), approx=True)
    score_ref[...] = s.astype(score_ref.dtype)
    energy_sc[...] = s            # reuse scratch: scores for the context pass

    # ---- pass 2: context = sum_t score_t * listener_t (sublane T reduce)
    ctx_sc[...] = jnp.zeros_like(ctx_sc)

    def ctx_chunk(c, carry):
        t0 = pl.multiple_of(c * t_chunk, t_chunk)
        s_c = energy_sc[:, pl.ds(t0, t_chunk)]                         # (bb, tc)
        lis_c = lis_ref[:, pl.ds(t0, t_chunk), :].astype(jnp.float32)  # (bb,tc,Dl)
        ctx_sc[...] += jnp.sum(s_c[:, :, None] * lis_c, axis=1)        # (bb, Dl)
        return carry

    lax.fori_loop(0, n_chunks, ctx_chunk, 0, unroll=unroll)
    ctx_ref[...] = ctx_sc[...].astype(ctx_ref.dtype)


# ----------------------------------------------------------------- wrapper ---

def attention_pallas(decoder_state, listener_feature, params, *,
                     activate="relu", batch_block=None, t_chunk=None,
                     stream_dtype=jnp.bfloat16,
                     vmem_budget_bytes=40 * 1024 * 1024):
    """decoder_state: (B, 1, Din), listener_feature: (B, T, Dl).

    Returns ([score (B, T)], context (B, Dl)) — same structure as the PyTorch
    Attention.forward return value (mode='dot', multi_head=1).
    """
    B, Q, Din = decoder_state.shape
    assert Q == 1, "decoder_state must be (B, 1, Din) like the torch module"
    Bl, T, Dl = listener_feature.shape
    assert Bl == B
    Dp = params["w_phi"].shape[1]

    # Pad T to a lane-dense multiple of 128 (unmasked score stores; no
    # tile-crossing reshapes in the kernel).
    T_pad = ((T + 127) // 128) * 128
    if T_pad != T:
        listener_feature = jnp.pad(listener_feature,
                                   ((0, 0), (0, T_pad - T), (0, 0)))

    if t_chunk is None:
        t_chunk = next(tc for tc in (512, 256, 128) if T_pad % tc == 0)

    dec2 = decoder_state[:, 0, :].astype(jnp.float32)            # (B, Din)
    lis = listener_feature.astype(stream_dtype)                  # (B, T_pad, Dl)
    w_phi = params["w_phi"].astype(jnp.float32)                  # (Din, Dp)
    b_phi = params["b_phi"].astype(jnp.float32).reshape(1, Dp)
    w_psi = params["w_psi"].astype(stream_dtype)                 # (Dl, Dp)
    b_psi = params["b_psi"].astype(jnp.float32).reshape(1, Dp)

    lis_item = jnp.dtype(lis.dtype).itemsize
    wpsi_item = jnp.dtype(w_psi.dtype).itemsize

    def est(bb):
        # rough VMEM estimate: double-buffered blocks + scratch + chunk temps
        blocks = (bb * T_pad * Dl * lis_item + bb * Din * 4
                  + Din * Dp * 4 + Dl * Dp * wpsi_item + 2 * Dp * 4
                  + bb * T_pad * 4 + bb * Dl * 4)
        scratch = bb * T_pad * 4 + bb * Dl * 4
        temps = 3 * bb * t_chunk * Dp * 4
        return 2 * blocks + scratch + temps

    if batch_block is None:
        if B % 8 == 0:
            cands = [bb for bb in (64, 32, 16, 8) if B % bb == 0]
        else:
            cands = [B]   # bb must be a multiple of 8 or equal B (sublane rule)
        batch_block = next((bb for bb in cands if est(bb) <= vmem_budget_bytes),
                           cands[-1])
        # TODO(synk): if even the smallest bb overflows VMEM (huge T*Dl), add a
        # T grid axis instead of shrinking bb further.
    bb = batch_block
    assert B % bb == 0

    vmem_limit = int(min(64 * 1024 * 1024,
                         max(32 * 1024 * 1024, 2 * est(bb))))

    kernel = functools.partial(_attention_kernel, activate=activate,
                               t_valid=T, t_chunk=t_chunk)

    score_p, ctx = pl.pallas_call(
        kernel,
        out_shape=(jax.ShapeDtypeStruct((B, T_pad), jnp.float32),
                   jax.ShapeDtypeStruct((B, Dl), jnp.float32)),
        grid=(B // bb,),
        in_specs=[
            pl.BlockSpec((bb, Din), lambda i: (i, 0)),            # decoder state
            pl.BlockSpec((bb, T_pad, Dl), lambda i: (i, 0, 0)),   # listener (bf16)
            pl.BlockSpec((Din, Dp), lambda i: (0, 0)),            # w_phi (resident)
            pl.BlockSpec((1, Dp), lambda i: (0, 0)),              # b_phi
            pl.BlockSpec((Dl, Dp), lambda i: (0, 0)),             # w_psi (resident)
            pl.BlockSpec((1, Dp), lambda i: (0, 0)),              # b_psi
        ],
        out_specs=(
            pl.BlockSpec((bb, T_pad), lambda i: (i, 0)),          # score (2D)
            pl.BlockSpec((bb, Dl), lambda i: (i, 0)),             # context (2D)
        ),
        scratch_shapes=[pltpu.VMEM((bb, T_pad), jnp.float32),     # energy / score
                        pltpu.VMEM((bb, Dl), jnp.float32)],       # context acc
        compiler_params=pltpu.CompilerParams(
            dimension_semantics=("parallel",),
            vmem_limit_bytes=vmem_limit),
    )(dec2, lis, w_phi, b_phi, w_psi, b_psi)

    score = score_p[:, :T] if T_pad != T else score_p
    return [score], ctx

# TODO(synk): multi_head > 1 (per-head split + dim_reduce Linear), the
# mlp_preprocess_input=False path and non-'dot' modes are not wired into this
# kernel; only the default single-head 'dot' + MLP-preprocess path is fused.


# ------------------------------------------------------------------ params ---

def init_attention_params(key, input_feature_dim, listener_feature_dim,
                          preprocess_mlp_dim):
    """nn.Linear default init U(-1/sqrt(in_features), 1/sqrt(in_features)).
    Weights are stored transposed: (in, out)."""
    k1, k2, k3, k4 = jax.random.split(key, 4)
    bp = 1.0 / np.sqrt(input_feature_dim)
    bs = 1.0 / np.sqrt(listener_feature_dim)
    return {
        "w_phi": jax.random.uniform(k1, (input_feature_dim, preprocess_mlp_dim),
                                    jnp.float32, -bp, bp),
        "b_phi": jax.random.uniform(k2, (1, preprocess_mlp_dim),
                                    jnp.float32, -bp, bp),
        "w_psi": jax.random.uniform(k3, (listener_feature_dim, preprocess_mlp_dim),
                                    jnp.float32, -bs, bs),
        "b_psi": jax.random.uniform(k4, (1, preprocess_mlp_dim),
                                    jnp.float32, -bs, bs),
    }


# ------------------------------------------------------- pure-JAX reference --

def attention_ref(decoder_state, listener_feature, params, activate="relu"):
    q = decoder_state @ params["w_phi"] + params["b_phi"]        # (B, 1, Dp)
    k = listener_feature @ params["w_psi"] + params["b_psi"]     # (B, T, Dp)
    if activate == "relu":
        q = jnp.maximum(q, 0.0)
        k = jnp.maximum(k, 0.0)
    energy = jnp.einsum("bqd,btd->bqt", q, k)[:, 0, :]           # (B, T)
    score = jax.nn.softmax(energy, axis=-1)
    context = jnp.einsum("bt,btd->bd", score, listener_feature)  # (B, Dl)
    return [score], context


# ----------------------------------------------------------------- main ------

if __name__ == "__main__":
    key = jax.random.PRNGKey(0)
    k_param, k_dec, k_lis = jax.random.split(key, 3)

    B, T = 2, 8
    INPUT_FEATURE_DIM = 64       # decoder-state feature dim
    LISTENER_FEATURE_DIM = 128   # listener feature dim (lane-dense)
    PREPROCESS_MLP_DIM = 128     # phi/psi output dim

    params = init_attention_params(k_param, INPUT_FEATURE_DIM,
                                   LISTENER_FEATURE_DIM, PREPROCESS_MLP_DIM)
    decoder_state = jax.random.normal(k_dec, (B, 1, INPUT_FEATURE_DIM),
                                      jnp.float32)
    listener_feature = jax.random.normal(k_lis, (B, T, LISTENER_FEATURE_DIM),
                                         jnp.float32)

    (score_ref_,), context_ref_ = attention_ref(decoder_state, listener_feature,
                                                params, activate="relu")

    # f32-streaming check (tight-ish tolerance; approx reciprocal + reorder)
    (score32,), context32 = attention_pallas(decoder_state, listener_feature,
                                             params, activate="relu",
                                             stream_dtype=jnp.float32)
    score32 = jax.block_until_ready(score32)
    context32 = jax.block_until_ready(context32)
    assert score32.shape == (B, T), score32.shape
    assert context32.shape == (B, LISTENER_FEATURE_DIM), context32.shape
    np.testing.assert_allclose(np.asarray(score32), np.asarray(score_ref_),
                               rtol=1e-2, atol=1e-2)
    np.testing.assert_allclose(np.asarray(context32), np.asarray(context_ref_),
                               rtol=1e-2, atol=1e-2)

    # default bf16-streaming path (what production would run)
    (score,), context = attention_pallas(decoder_state, listener_feature,
                                         params, activate="relu")
    score = jax.block_until_ready(score)
    context = jax.block_until_ready(context)
    assert score.shape == (B, T), score.shape
    assert context.shape == (B, LISTENER_FEATURE_DIM), context.shape
    np.testing.assert_allclose(np.asarray(score), np.asarray(score_ref_),
                               rtol=2e-2, atol=2e-2)
    np.testing.assert_allclose(np.asarray(context), np.asarray(context_ref_),
                               rtol=2e-2, atol=2e-2)

    print("KERNEL_OK")
</pallas_src>

<mosaic_0001>
module attributes {stable_mosaic.version = 11 : i64} {
  func.func @_attention_kernel(%arg0: i32, %arg1: memref<2x64xf32, #tpu.memory_space<vmem>>, %arg2: memref<2x128x128xf32, #tpu.memory_space<vmem>>, %arg3: memref<64x128xf32, #tpu.memory_space<vmem>>, %arg4: memref<1x128xf32, #tpu.memory_space<vmem>>, %arg5: memref<128x128xf32, #tpu.memory_space<vmem>>, %arg6: memref<1x128xf32, #tpu.memory_space<vmem>>, %arg7: memref<2x128xf32, #tpu.memory_space<vmem>>, %arg8: memref<2x128xf32, #tpu.memory_space<vmem>>, %arg9: memref<2x128xf32, #tpu.memory_space<vmem>>, %arg10: memref<2x128xf32, #tpu.memory_space<vmem>>) attributes {dimension_semantics = [#tpu.dimension_semantics<parallel>], iteration_bounds = array<i64: 1>, scalar_prefetch = 0 : i64, scratch_operands = 2 : i64, tpu.core_type = #tpu.core_type<tc>, window_params = [{transform_indices = @transform_0, window_bounds = array<i64: 2, 64>}, {transform_indices = @transform_1, window_bounds = array<i64: 2, 128, 128>}, {pipeline_mode = #tpu.pipeline_mode<synchronous>, transform_indices = @transform_2, window_bounds = array<i64: 64, 128>}, {pipeline_mode = #tpu.pipeline_mode<synchronous>, transform_indices = @transform_3, window_bounds = array<i64: 1, 128>}, {pipeline_mode = #tpu.pipeline_mode<synchronous>, transform_indices = @transform_4, window_bounds = array<i64: 128, 128>}, {pipeline_mode = #tpu.pipeline_mode<synchronous>, transform_indices = @transform_5, window_bounds = array<i64: 1, 128>}, {transform_indices = @transform_6, window_bounds = array<i64: 2, 128>}, {transform_indices = @transform_7, window_bounds = array<i64: 2, 128>}]} {
    %c0 = arith.constant 0 : index
    %c0_0 = arith.constant 0 : index
    %0 = vector.load %arg1[%c0, %c0_0] : memref<2x64xf32, #tpu.memory_space<vmem>>, vector<2x64xf32>
    %c0_1 = arith.constant 0 : index
    %c0_2 = arith.constant 0 : index
    %1 = vector.load %arg3[%c0_1, %c0_2] : memref<64x128xf32, #tpu.memory_space<vmem>>, vector<64x128xf32>
    %cst = arith.constant dense<0.000000e+00> : vector<2x128xf32>
    %2 = tpu.matmul %0, %1, %cst {dimension_numbers = #tpu.dot_dimension_numbers<[1], [0], [0], [1], [0, 0, 1, 1], [], []>} : vector<2x64xf32>, vector<64x128xf32>, vector<2x128xf32> -> vector<2x128xf32>
    %c0_3 = arith.constant 0 : index
    %c0_4 = arith.constant 0 : index
    %3 = vector.load %arg4[%c0_3, %c0_4] : memref<1x128xf32, #tpu.memory_space<vmem>>, vector<1x128xf32>
    %4 = vector.broadcast %3 : vector<1x128xf32> to vector<2x128xf32>
    %5 = arith.addf %2, %4 : vector<2x128xf32>
    %cst_5 = arith.constant 0.000000e+00 : f32
    %6 = vector.broadcast %cst_5 : f32 to vector<2x128xf32>
    %7 = arith.maximumf %5, %6 : vector<2x128xf32>
    %c0_6 = arith.constant 0 : index
    %c0_7 = arith.constant 0 : index
    %8 = vector.load %arg5[%c0_6, %c0_7] : memref<128x128xf32, #tpu.memory_space<vmem>>, vector<128x128xf32>
    %c0_8 = arith.constant 0 : index
    %c0_9 = arith.constant 0 : index
    %9 = vector.load %arg6[%c0_8, %c0_9] : memref<1x128xf32, #tpu.memory_space<vmem>>, vector<1x128xf32>
    %c0_i32 = arith.constant 0 : i32
    %c128_i32 = arith.constant 128 : i32
    %10 = arith.muli %c0_i32, %c128_i32 : i32
    %11 = tpu.assume_multiple %10, 128 : i32
    %c0_10 = arith.constant 0 : index
    %12 = arith.index_cast %11 : i32 to index
    %c0_11 = arith.constant 0 : index
    %13 = vector.load %arg2[%c0_10, %12, %c0_11] : memref<2x128x128xf32, #tpu.memory_space<vmem>>, vector<2x128x128xf32>
    %14 = vector.shape_cast %13 : vector<2x128x128xf32> to vector<256x128xf32>
    %cst_12 = arith.constant dense<0.000000e+00> : vector<256x128xf32>
    %15 = tpu.matmul %14, %8, %cst_12 {dimension_numbers = #tpu.dot_dimension_numbers<[1], [0], [0], [1], [0, 0, 1, 1], [], []>} : vector<256x128xf32>, vector<128x128xf32>, vector<256x128xf32> -> vector<256x128xf32>
    %16 = vector.broadcast %9 : vector<1x128xf32> to vector<256x128xf32>
    %17 = arith.addf %15, %16 : vector<256x128xf32>
    %cst_13 = arith.constant 0.000000e+00 : f32
    %18 = vector.broadcast %cst_13 : f32 to vector<256x128xf32>
    %19 = arith.maximumf %17, %18 : vector<256x128xf32>
    %20 = vector.shape_cast %19 : vector<256x128xf32> to vector<2x128x128xf32>
    %21 = vector.shape_cast %7 : vector<2x128xf32> to vector<2x1x128xf32>
    %22 = vector.broadcast %21 : vector<2x1x128xf32> to vector<2x128x128xf32>
    %23 = arith.mulf %22, %20 : vector<2x128x128xf32>
    %cst_14 = arith.constant dense<0.000000e+00> : vector<2x128xf32>
    %24 = vector.multi_reduction <add>, %23, %cst_14 [2] : vector<2x128x128xf32> to vector<2x128xf32>
    %c0_15 = arith.constant 0 : index
    %25 = arith.index_cast %11 : i32 to index
    %26 = vector.load %arg9[%c0_15, %25] : memref<2x128xf32, #tpu.memory_space<vmem>>, vector<2x128xf32>
    tpu.vector_store %arg9[%c0_15, %25], %24 {strides = array<i32>} : memref<2x128xf32, #tpu.memory_space<vmem>>, vector<2x128xf32>,
    %c1_i32 = arith.constant 1 : i32
    %c0_16 = arith.constant 0 : index
    %c0_17 = arith.constant 0 : index
    %27 = vector.load %arg9[%c0_16, %c0_17] : memref<2x128xf32, #tpu.memory_space<vmem>>, vector<2x128xf32>
    %28 = tpu.iota {dimensions = array<i32: 1>} : vector<2x128xi32>
    %c8_i32 = arith.constant 8 : i32
    %29 = vector.broadcast %c8_i32 : i32 to vector<2x128xi32>
    %30 = arith.cmpi slt, %28, %29 : vector<2x128xi32>
    %cst_18 = arith.constant -1.000000e+30 : f32
    %31 = vector.broadcast %cst_18 : f32 to vector<2x128xf32>
    %32 = arith.select %30, %27, %31 : vector<2x128xi1>, vector<2x128xf32>
    %cst_19 = arith.constant dense<0xFF800000> : vector<2xf32>
    %33 = vector.multi_reduction <maximumf>, %32, %cst_19 [1] : vector<2x128xf32> to vector<2xf32>
    %34 = vector.shape_cast %33 : vector<2xf32> to vector<2x1xf32>
    %35 = vector.broadcast %34 : vector<2x1xf32> to vector<2x128xf32>
    %36 = arith.subf %32, %35 : vector<2x128xf32>
    %37 = math.exp %36 : vector<2x128xf32>
    %cst_20 = arith.constant dense<0.000000e+00> : vector<2xf32>
    %38 = vector.multi_reduction <add>, %37, %cst_20 [1] : vector<2x128xf32> to vector<2xf32>
    %39 = vector.shape_cast %38 : vector<2xf32> to vector<2x1xf32>
    %40 = tpu.reciprocal %39 {approx = true} : vector<2x1xf32> -> vector<2x1xf32>
    %41 = vector.broadcast %40 : vector<2x1xf32> to vector<2x128xf32>
    %42 = arith.mulf %37, %41 : vector<2x128xf32>
    %c0_21 = arith.constant 0 : index
    %c0_22 = arith.constant 0 : index
    %43 = vector.load %arg7[%c0_21, %c0_22] : memref<2x128xf32, #tpu.memory_space<vmem>>, vector<2x128xf32>
    tpu.vector_store %arg7[%c0_21, %c0_22], %42 {strides = array<i32>} : memref<2x128xf32, #tpu.memory_space<vmem>>, vector<2x128xf32>,
    %c0_23 = arith.constant 0 : index
    %c0_24 = arith.constant 0 : index
    %44 = vector.load %arg9[%c0_23, %c0_24] : memref<2x128xf32, #tpu.memory_space<vmem>>, vector<2x128xf32>
    tpu.vector_store %arg9[%c0_23, %c0_24], %42 {strides = array<i32>} : memref<2x128xf32, #tpu.memory_space<vmem>>, vector<2x128xf32>,
    %cst_25 = arith.constant 0.000000e+00 : f32
    %45 = vector.broadcast %cst_25 : f32 to vector<2x128xf32>
    %c0_26 = arith.constant 0 : index
    %c0_27 = arith.constant 0 : index
    %46 = vector.load %arg10[%c0_26, %c0_27] : memref<2x128xf32, #tpu.memory_space<vmem>>, vector<2x128xf32>
    tpu.vector_store %arg10[%c0_26, %c0_27], %45 {strides = array<i32>} : memref<2x128xf32, #tpu.memory_space<vmem>>, vector<2x128xf32>,
    %c0_i32_28 = arith.constant 0 : i32
    %c128_i32_29 = arith.constant 128 : i32
    %47 = arith.muli %c0_i32_28, %c128_i32_29 : i32
    %48 = tpu.assume_multiple %47, 128 : i32
    %c0_30 = arith.constant 0 : index
    %49 = arith.index_cast %48 : i32 to index
    %50 = vector.load %arg9[%c0_30, %49] : memref<2x128xf32, #tpu.memory_space<vmem>>, vector<2x128xf32>
    %c0_31 = arith.constant 0 : index
    %51 = arith.index_cast %48 : i32 to index
    %c0_32 = arith.constant 0 : index
    %52 = vector.load %arg2[%c0_31, %51, %c0_32] : memref<2x128x128xf32, #tpu.memory_space<vmem>>, vector<2x128x128xf32>
    %c0_33 = arith.constant 0 : index
    %c0_34 = arith.constant 0 : index
    %53 = vector.load %arg10[%c0_33, %c0_34] : memref<2x128xf32, #tpu.memory_space<vmem>>, vector<2x128xf32>
    %54 = vector.shape_cast %50 : vector<2x128xf32> to vector<2x128x1xf32>
    %55 = vector.broadcast %54 : vector<2x128x1xf32> to vector<2x128x128xf32>
    %56 = arith.mulf %55, %52 : vector<2x128x128xf32>
    %cst_35 = arith.constant dense<0.000000e+00> : vector<2x128xf32>
    %57 = vector.multi_reduction <add>, %56, %cst_35 [1] : vector<2x128x128xf32> to vector<2x128xf32>
    %58 = arith.addf %53, %57 : vector<2x128xf32>
    %c0_36 = arith.constant 0 : index
    %c0_37 = arith.constant 0 : index
    %59 = vector.load %arg10[%c0_36, %c0_37] : memref<2x128xf32, #tpu.memory_space<vmem>>, vector<2x128xf32>
    tpu.vector_store %arg10[%c0_36, %c0_37], %58 {strides = array<i32>} : memref<2x128xf32, #tpu.memory_space<vmem>>, vector<2x128xf32>,
    %c1_i32_38 = arith.constant 1 : i32
    %c0_39 = arith.constant 0 : index
    %c0_40 = arith.constant 0 : index
    %60 = vector.load %arg10[%c0_39, %c0_40] : memref<2x128xf32, #tpu.memory_space<vmem>>, vector<2x128xf32>
    %c0_41 = arith.constant 0 : index
    %c0_42 = arith.constant 0 : index
    %61 = vector.load %arg8[%c0_41, %c0_42] : memref<2x128xf32, #tpu.memory_space<vmem>>, vector<2x128xf32>
    tpu.vector_store %arg8[%c0_41, %c0_42], %60 {strides = array<i32>} : memref<2x128xf32, #tpu.memory_space<vmem>>, vector<2x128xf32>,
    return
  }
  func.func @transform_0(%arg0: i32) -> (i32, i32) {
    %c0_i32 = arith.constant 0 : i32
    %c0_i32_0 = arith.constant 0 : i32
    return %arg0, %c0_i32 : i32, i32
  }
  func.func @transform_1(%arg0: i32) -> (i32, i32, i32) {
    %c0_i32 = arith.constant 0 : i32
    %c0_i32_0 = arith.constant 0 : i32
    %c0_i32_1 = arith.constant 0 : i32
    return %arg0, %c0_i32, %c0_i32_0 : i32, i32, i32
  }
  func.func @transform_2(%arg0: i32) -> (i32, i32) {
    %c0_i32 = arith.constant 0 : i32
    %c0_i32_0 = arith.constant 0 : i32
    %c0_i32_1 = arith.constant 0 : i32
    return %c0_i32, %c0_i32_0 : i32, i32
  }
  func.func @transform_3(%arg0: i32) -> (i32, i32) {
    %c0_i32 = arith.constant 0 : i32
    %c0_i32_0 = arith.constant 0 : i32
    %c0_i32_1 = arith.constant 0 : i32
    return %c0_i32, %c0_i32_0 : i32, i32
  }
  func.func @transform_4(%arg0: i32) -> (i32, i32) {
    %c0_i32 = arith.constant 0 : i32
    %c0_i32_0 = arith.constant 0 : i32
    %c0_i32_1 = arith.constant 0 : i32
    return %c0_i32, %c0_i32_0 : i32, i32
  }
  func.func @transform_5(%arg0: i32) -> (i32, i32) {
    %c0_i32 = arith.constant 0 : i32
    %c0_i32_0 = arith.constant 0 : i32
    %c0_i32_1 = arith.constant 0 : i32
    return %c0_i32, %c0_i32_0 : i32, i32
  }
  func.func @transform_6(%arg0: i32) -> (i32, i32) {
    %c0_i32 = arith.constant 0 : i32
    %c0_i32_0 = arith.constant 0 : i32
    return %arg0, %c0_i32 : i32, i32
  }
  func.func @transform_7(%arg0: i32) -> (i32, i32) {
    %c0_i32 = arith.constant 0 : i32
    %c0_i32_0 = arith.constant 0 : i32
    return %arg0, %c0_i32 : i32, i32
  }
}

</mosaic_0001>

<llo_original>
// kernel: tpu_custom_call.1
$region0: #{tpu_custom_call.1}
  #allocation0 [shape = 'u32[]', space=smem, size = 0x4, offset = 0x4, fixed_abs, tag = 'smem constant byte address 0x4 - core index']
  #allocation1 [shape = 'u32[144,128]{1,0:T(1,128)}', space=vmem, size = 0x12000, scoped, tag = 'internal scratch']
  #allocation2 [shape = 'f32[2,128]{1,0:T(2,128)}', space=vmem, size = 0x400, scoped, tag = 'scratch operand']
  #allocation3 [shape = 'f32[2,128]{1,0:T(2,128)}', space=vmem, size = 0x400, scoped, tag = 'scratch operand']
  %s0 = inlined_call_operand.hbm [shape: f32[2,64], index: 0, kind: input, shape index: {}]
  %s1 = inlined_call_operand.hbm [shape: f32[2,128,128], index: 1, kind: input, shape index: {}]
  %s2 = inlined_call_operand.hbm [shape: f32[64,128], index: 2, kind: input, shape index: {}]
  %s3 = inlined_call_operand.vmem [shape: f32[1,128], index: 3, kind: input, shape index: {}]
  %s4 = inlined_call_operand.hbm [shape: f32[128,128], index: 4, kind: input, shape index: {}]
  %s5 = inlined_call_operand.vmem [shape: f32[1,128], index: 5, kind: input, shape index: {}]
  %s6 = inlined_call_operand.hbm [shape: f32[2,128], index: 6, kind: output, shape index: {0}]
  %s7 = inlined_call_operand.hbm [shape: f32[2,128], index: 7, kind: output, shape index: {1}]
  %8 = xla_tuple %s6, %s7
  %s9 = sld [smem:[#allocation0]]
  $region58: #{tpu_custom_call.1} parent=0
    _
  %s11 = ssub.s32 1, %s9
  %s12 = scalar_select 0, %s11, %s9
  $region1: #{tpu_custom_call.1} parent=0
    #allocation4 [shape = 'u8[1024]{0}', space=vmem, size = 0x400, scoped, tag = 'input window, operand 0, single buffered']
    #allocation5 [shape = 's32[1]{0}', space=sflag, size = 0x4, scoped, tag = 'scoped memory for tpu_custom_call.1']
    #allocation6 [shape = 's32[1]{0}', space=sflag, size = 0x4, scoped, tag = 'scoped memory for tpu_custom_call.1']
    #allocation7 [shape = 'u8[131072]{0}', space=vmem, size = 0x20000, scoped, tag = 'input window, operand 1, single buffered']
    #allocation8 [shape = 's32[1]{0}', space=sflag, size = 0x4, scoped, tag = 'scoped memory for tpu_custom_call.1']
    #allocation9 [shape = 'u8[32768]{0}', space=vmem, size = 0x8000, scoped, tag = 'input window, operand 2, single buffered']
    #allocation10 [shape = 'u8[65536]{0}', space=vmem, size = 0x10000, scoped, tag = 'input window, operand 4, single buffered']
    #allocation11 [shape = 's32[1]{0}', space=sflag, size = 0x4, scoped, tag = 'scoped memory for tpu_custom_call.1']
    #allocation12 [shape = 'u8[1024]{0}', space=vmem, size = 0x400, scoped, tag = 'output window, operand 0, single buffered']
    #allocation13 [shape = 'u8[1024]{0}', space=vmem, size = 0x400, scoped, tag = 'output window, operand 1, single buffered']
    #allocation14 [shape = 's32[1]{0}', space=sflag, size = 0x4, scoped, tag = 'scoped memory for tpu_custom_call.1']
    %13 = vsyncpa [#allocation5], 0
    %14 = vsyncpa [#allocation8], 0
    %15 = vsyncpa [#allocation11], 0
    %16 = vsyncpa [#allocation6], 0
    %17 = vsyncpa [#allocation14], 0
    // Predicated region
    $region2: #{tpu_custom_call.1} parent=1 // pred_check
      _
    $region3: #{tpu_custom_call.1} parent=1 // pred_check_branch
      %19 = sbr.rel (0) target = $region5
    $region4: #{tpu_custom_call.1} parent=1 // pred_region
      %s21 = ssub.s32 32, 32
      %22 = vsyncadd [#allocation5], %s21
      %s24 = sshll.u32 [#allocation4], 4
      %s25 = int_to_ptr.vmem [resolvable:$true] %s24
      %27 = dma.hbm_to_vmem [thread:$0]  %s0, 32, %s25, [#allocation5]
    $region5: #{tpu_custom_call.1} parent=1 // pred_fallthru
      _
    // Predicated region
    $region6: #{tpu_custom_call.1} parent=1 // pred_check
      _
    $region7: #{tpu_custom_call.1} parent=1 // pred_check_branch
      %29 = sbr.rel (0) target = $region9
    $region8: #{tpu_custom_call.1} parent=1 // pred_region
      %s31 = ssub.s32 4096, 4096
      %32 = vsyncadd [#allocation8], %s31
      %s33 = sshll.u32 [#allocation7], 4
      %s34 = int_to_ptr.vmem [resolvable:$true] %s33
      %39 = dma.hbm_to_vmem [thread:$0]  %s1, 4096, %s34, [#allocation8], 128, 128, 8
    $region9: #{tpu_custom_call.1} parent=1 // pred_fallthru
      _
    // Predicated region
    $region10: #{tpu_custom_call.1} parent=1 // pred_check
      _
    $region11: #{tpu_custom_call.1} parent=1 // pred_check_branch
      %41 = sbr.rel (0) target = $region13
    $region12: #{tpu_custom_call.1} parent=1 // pred_region
      %s43 = ssub.s32 1024, 1024
      %44 = vsyncadd [#allocation8], %s43
      %s45 = sshll.u32 [#allocation9], 4
      %s46 = int_to_ptr.vmem [resolvable:$true] %s45
      %51 = dma.hbm_to_vmem [thread:$0]  %s2, 1024, %s46, [#allocation8], 128, 128, 8
    $region13: #{tpu_custom_call.1} parent=1 // pred_fallthru
      _
    // Predicated region
    $region14: #{tpu_custom_call.1} parent=1 // pred_check
      _
    $region15: #{tpu_custom_call.1} parent=1 // pred_check_branch
      %53 = sbr.rel (0) target = $region17
    $region16: #{tpu_custom_call.1} parent=1 // pred_region
      _
    $region17: #{tpu_custom_call.1} parent=1 // pred_fallthru
      _
    // Predicated region
    $region18: #{tpu_custom_call.1} parent=1 // pred_check
      _
    $region19: #{tpu_custom_call.1} parent=1 // pred_check_branch
      %55 = sbr.rel (0) target = $region21
    $region20: #{tpu_custom_call.1} parent=1 // pred_region
      %s57 = ssub.s32 2048, 2048
      %58 = vsyncadd [#allocation11], %s57
      %s59 = sshll.u32 [#allocation10], 4
      %s60 = int_to_ptr.vmem [resolvable:$true] %s59
      %65 = dma.hbm_to_vmem [thread:$0]  %s4, 2048, %s60, [#allocation11], 128, 128, 8
    $region21: #{tpu_custom_call.1} parent=1 // pred_fallthru
      _
    // Predicated region
    $region22: #{tpu_custom_call.1} parent=1 // pred_check
      _
    $region23: #{tpu_custom_call.1} parent=1 // pred_check_branch
      %67 = sbr.rel (0) target = $region25
    $region24: #{tpu_custom_call.1} parent=1 // pred_region
      _
    $region25: #{tpu_custom_call.1} parent=1 // pred_fallthru
      _
    // Predicated region
    $region26: #{tpu_custom_call.1} parent=1 // pred_check
      _
    $region27: #{tpu_custom_call.1} parent=1 // pred_check_branch
      %69 = sbr.rel (0) target = $region29
    $region28: #{tpu_custom_call.1} parent=1 // pred_region
      %70 = dma.done [#allocation5], 32
    $region29: #{tpu_custom_call.1} parent=1 // pred_fallthru
      _
    // Predicated region
    $region30: #{tpu_custom_call.1} parent=1 // pred_check
      _
    $region31: #{tpu_custom_call.1} parent=1 // pred_check_branch
      %72 = sbr.rel (0) target = $region33
    $region32: #{tpu_custom_call.1} parent=1 // pred_region
      %73 = dma.done [#allocation8], 4096
    $region33: #{tpu_custom_call.1} parent=1 // pred_fallthru
      _
    // Predicated region
    $region34: #{tpu_custom_call.1} parent=1 // pred_check
      _
    $region35: #{tpu_custom_call.1} parent=1 // pred_check_branch
      %75 = sbr.rel (0) target = $region37
    $region36: #{tpu_custom_call.1} parent=1 // pred_region
      %76 = dma.done [#allocation8], 1024
    $region37: #{tpu_custom_call.1} parent=1 // pred_fallthru
      _
    // Predicated region
    $region38: #{tpu_custom_call.1} parent=1 // pred_check
      _
    $region39: #{tpu_custom_call.1} parent=1 // pred_check_branch
      %78 = sbr.rel (0) target = $region41
    $region40: #{tpu_custom_call.1} parent=1 // pred_region
      %79 = dma.done [#allocation11], 2048
    $region41: #{tpu_custom_call.1} parent=1 // pred_fallthru
      _
    %v80 = vld [vmem:[#allocation4] sm:$0x3]
    %v81 = vld [vmem:[#allocation9] sm:$0xff]
    %v82 = vld [vmem:[#allocation9 + $0x8] sm:$0xff]
    %v83 = vld [vmem:[#allocation9 + $0x10] sm:$0xff]
    %v84 = vld [vmem:[#allocation9 + $0x18] sm:$0xff]
    %v85 = vld [vmem:[#allocation9 + $0x20] sm:$0xff]
    %v86 = vld [vmem:[#allocation9 + $0x28] sm:$0xff]
    %v87 = vld [vmem:[#allocation9 + $0x30] sm:$0xff]
    %v88 = vld [vmem:[#allocation9 + $0x38] sm:$0xff]
    %v89 = vld [vmem:[%s3] sm:$0x1]
    %v91 = vlaneseq
    %v92 = vshrl.u32 %v91, 7
    %v93 = vsub.s32 0, %v92
    %v94 = vrot.slane %v89, %v93
    %vm96 = vcmask 523264
    %v98 = vsel %vm96, %v80, 0
    %100 = vmatprep.subr.mxu0 0.0
    %101 = vmatpush1.msra.mxu0 %v81
    %102 = vmatprep.subr.mxu0 0.0
    %103 = vmatpush1.msra.mxu0 %v82
    %104 = vmatprep.subr.mxu0 0.0
    %105 = vmatpush1.msra.mxu0 %v83
    %106 = vmatprep.subr.mxu0 0.0
    %107 = vmatpush1.msra.mxu0 %v84
    %108 = vmatprep.subr.mxu0 0.0
    %109 = vmatpush1.msra.mxu0 %v85
    %110 = vmatprep.subr.mxu0 0.0
    %111 = vmatpush1.msra.mxu0 %v86
    %112 = vmatprep.subr.mxu0 0.0
    %113 = vmatpush1.msra.mxu0 %v87
    %114 = vmatprep.subr.mxu0 0.0
    %115 = vmatpush1.msra.mxu0 %v88
    %116 = vmatprep.subr.mxu0 0.0
    %117 = vmatpush1.msra.mxu0 0.0
    %118 = vmatprep.subr.mxu0 0.0
    %119 = vmatpush1.msra.mxu0 0.0
    %120 = vmatprep.subr.mxu0 0.0
    %121 = vmatpush1.msra.mxu0 0.0
    %122 = vmatprep.subr.mxu0 0.0
    %123 = vmatpush1.msra.mxu0 0.0
    %124 = vmatprep.subr.mxu0 0.0
    %125 = vmatpush1.msra.mxu0 0.0
    %126 = vmatprep.subr.mxu0 0.0
    %127 = vmatpush1.msra.mxu0 0.0
    %128 = vmatprep.subr.mxu0 0.0
    %129 = vmatpush1.msra.mxu0 0.0
    %130 = vmatprep.subr.mxu0 0.0
    %131 = vmatpush1.msra.mxu0 0.0
    %132 = vmatprep.subr.mxu0 0.0
    %133 = vmatpush1.msra.mxu0 0.0
    %134 = vmatprep.subr.mxu0 0.0
    %135 = vmatpush1.msra.mxu0 0.0
    %136 = vmatprep.subr.mxu0 0.0
    %137 = vmatpush1.msra.mxu0 0.0
    %138 = vmatprep.subr.mxu0 0.0
    %139 = vmatpush1.msra.mxu0 0.0
    %140 = vmatprep.subr.mxu0 0.0
    %141 = vmatpush1.msra.mxu0 0.0
    %142 = vmatprep.subr.mxu0 0.0
    %143 = vmatpush1.msra.mxu0 0.0
    %144 = vmatprep.subr.mxu0 0.0
    %145 = vmatpush1.msra.mxu0 0.0
    %146 = vmatprep.subr.mxu0 0.0
    %147 = vmatpush1.msra.mxu0 0.0
    %148 = vmatprep.subr.mxu0 0.0
    %149 = vmatpush1.msra.mxu0 0.0
    %150 = vmatprep.subr.mxu0 0.0
    %151 = vmatpush1.msra.mxu0 0.0
    %152 = vmatprep.subr.mxu0 0.0
    %153 = vmatpush1.msra.mxu0 0.0
    %154 = vmatprep.subr.mxu0 0.0
    %155 = vmatpush1.msra.mxu0 0.0
    %156 = vmatprep.subr.mxu0 0.0
    %157 = vmatpush1.msra.mxu0 0.0
    %158 = vmatprep.subr.mxu0 0.0
    %159 = vmatpush1.msra.mxu0 0.0
    %160 = vmatprep.subr.mxu0 0.0
    %161 = vmatpush1.msra.mxu0 0.0
    %162 = vmatprep.subr.mxu0 0.0
    %163 = vmatpush1.msra.mxu0 0.0
    %164 = vmatprep.mubr.f32.mxu0 0.0
    %165 = vmatmul.mubr.f32.gmra.mrb[0].mxu0 %v98
    %v166 = vpop.f32.mrb[0].mxu0
    %v167 = vadd.f32 %v94, %v166
    %v168 = vpop.f32.mrb[0].mxu0
    %169 = vdwg.mxu0
    %v170 = vmax.f32 %v167, 0.0
    %v171 = vld [vmem:[#allocation10] sm:$0xff]
    %v172 = vld [vmem:[#allocation10 + $0x8] sm:$0xff]
    %v173 = vld [vmem:[#allocation10 + $0x10] sm:$0xff]
    %v174 = vld [vmem:[#allocation10 + $0x18] sm:$0xff]
    %v175 = vld [vmem:[#allocation10 + $0x20] sm:$0xff]
    %v176 = vld [vmem:[#allocation10 + $0x28] sm:$0xff]
    %v177 = vld [vmem:[#allocation10 + $0x30] sm:$0xff]
    %v178 = vld [vmem:[#allocation10 + $0x38] sm:$0xff]
    %v179 = vld [vmem:[#allocation10 + $0x40] sm:$0xff]
    %v180 = vld [vmem:[#allocation10 + $0x48] sm:$0xff]
    %v181 = vld [vmem:[#allocation10 + $0x50] sm:$0xff]
    %v182 = vld [vmem:[#allocation10 + $0x58] sm:$0xff]
    %v183 = vld [vmem:[#allocation10 + $0x60] sm:$0xff]
    %v184 = vld [vmem:[#allocation10 + $0x68] sm:$0xff]
    %v185 = vld [vmem:[#allocation10 + $0x70] sm:$0xff]
    %v186 = vld [vmem:[#allocation10 + $0x78] sm:$0xff]
    %v187 = vld [vmem:[%s5] sm:$0x1]
    %v188 = vld [vmem:[#allocation7] sm:$0xff]
    %v189 = vld [vmem:[#allocation7 + $0x8] sm:$0xff]
    %v190 = vld [vmem:[#allocation7 + $0x10] sm:$0xff]
    %v191 = vld [vmem:[#allocation7 + $0x18] sm:$0xff]
    %v192 = vld [vmem:[#allocation7 + $0x20] sm:$0xff]
    %v193 = vld [vmem:[#allocation7 + $0x28] sm:$0xff]
    %v194 = vld [vmem:[#allocation7 + $0x30] sm:$0xff]
    %v195 = vld [vmem:[#allocation7 + $0x38] sm:$0xff]
    %v196 = vld [vmem:[#allocation7 + $0x40] sm:$0xff]
    %v197 = vld [vmem:[#allocation7 + $0x48] sm:$0xff]
    %v198 = vld [vmem:[#allocation7 + $0x50] sm:$0xff]
    %v199 = vld [vmem:[#allocation7 + $0x58] sm:$0xff]
    %v200 = vld [vmem:[#allocation7 + $0x60] sm:$0xff]
    %v201 = vld [vmem:[#allocation7 + $0x68] sm:$0xff]
    %v202 = vld [vmem:[#allocation7 + $0x70] sm:$0xff]
    %v203 = vld [vmem:[#allocation7 + $0x78] sm:$0xff]
    %v204 = vld [vmem:[#allocation7 + $0x80] sm:$0xff]
    %v205 = vld [vmem:[#allocation7 + $0x88] sm:$0xff]
    %v206 = vld [vmem:[#allocation7 + $0x90] sm:$0xff]
    %v207 = vld [vmem:[#allocation7 + $0x98] sm:$0xff]
    %v208 = vld [vmem:[#allocation7 + $0xa0] sm:$0xff]
    %v209 = vld [vmem:[#allocation7 + $0xa8] sm:$0xff]
    %v210 = vld [vmem:[#allocation7 + $0xb0] sm:$0xff]
    %v211 = vld [vmem:[#allocation7 + $0xb8] sm:$0xff]
    %v212 = vld [vmem:[#allocation7 + $0xc0] sm:$0xff]
    %v213 = vld [vmem:[#allocation7 + $0xc8] sm:$0xff]
    %v214 = vld [vmem:[#allocation7 + $0xd0] sm:$0xff]
    %v215 = vld [vmem:[#allocation7 + $0xd8] sm:$0xff]
    %v216 = vld [vmem:[#allocation7 + $0xe0] sm:$0xff]
    %v217 = vld [vmem:[#allocation7 + $0xe8] sm:$0xff]
    %v218 = vld [vmem:[#allocation7 + $0xf0] sm:$0xff]
    %v219 = vld [vmem:[#allocation7 + $0xf8] sm:$0xff]
    %v221 = vlaneseq
    %v222 = vshrl.u32 %v221, 7
    %v223 = vsub.s32 0, %v222
    %v224 = vrot.slane %v187, %v223
    %226 = vmatprep.subr.mxu0 0.0
    %227 = vmatpush1.msra.mxu0 %v171
    %228 = vmatprep.subr.mxu0 0.0
    %229 = vmatpush1.msra.mxu0 %v172
    %230 = vmatprep.subr.mxu0 0.0
    %231 = vmatpush1.msra.mxu0 %v173
    %232 = vmatprep.subr.mxu0 0.0
    %233 = vmatpush1.msra.mxu0 %v174
    %234 = vmatprep.subr.mxu0 0.0
    %235 = vmatpush1.msra.mxu0 %v175
    %236 = vmatprep.subr.mxu0 0.0
    %237 = vmatpush1.msra.mxu0 %v176
    %238 = vmatprep.subr.mxu0 0.0
    %239 = vmatpush1.msra.mxu0 %v177
    %240 = vmatprep.subr.mxu0 0.0
    %241 = vmatpush1.msra.mxu0 %v178
    %242 = vmatprep.subr.mxu0 0.0
    %243 = vmatpush1.msra.mxu0 %v179
    %244 = vmatprep.subr.mxu0 0.0
    %245 = vmatpush1.msra.mxu0 %v180
    %246 = vmatprep.subr.mxu0 0.0
    %247 = vmatpush1.msra.mxu0 %v181
    %248 = vmatprep.subr.mxu0 0.0
    %249 = vmatpush1.msra.mxu0 %v182
    %250 = vmatprep.subr.mxu0 0.0
    %251 = vmatpush1.msra.mxu0 %v183
    %252 = vmatprep.subr.mxu0 0.0
    %253 = vmatpush1.msra.mxu0 %v184
    %254 = vmatprep.subr.mxu0 0.0
    %255 = vmatpush1.msra.mxu0 %v185
    %256 = vmatprep.subr.mxu0 0.0
    %257 = vmatpush1.msra.mxu0 %v186
    %258 = vmatprep.subr.mxu0 0.0
    %259 = vmatpush1.msra.mxu0 0.0
    %260 = vmatprep.subr.mxu0 0.0
    %261 = vmatpush1.msra.mxu0 0.0
    %262 = vmatprep.subr.mxu0 0.0
    %263 = vmatpush1.msra.mxu0 0.0
    %264 = vmatprep.subr.mxu0 0.0
    %265 = vmatpush1.msra.mxu0 0.0
    %266 = vmatprep.subr.mxu0 0.0
    %267 = vmatpush1.msra.mxu0 0.0
    %268 = vmatprep.subr.mxu0 0.0
    %269 = vmatpush1.msra.mxu0 0.0
    %270 = vmatprep.subr.mxu0 0.0
    %271 = vmatpush1.msra.mxu0 0.0
    %272 = vmatprep.subr.mxu0 0.0
    %273 = vmatpush1.msra.mxu0 0.0
    %274 = vmatprep.subr.mxu0 0.0
    %275 = vmatpush1.msra.mxu0 0.0
    %276 = vmatprep.subr.mxu0 0.0
    %277 = vmatpush1.msra.mxu0 0.0
    %278 = vmatprep.subr.mxu0 0.0
    %279 = vmatpush1.msra.mxu0 0.0
    %280 = vmatprep.subr.mxu0 0.0
    %281 = vmatpush1.msra.mxu0 0.0
    %282 = vmatprep.subr.mxu0 0.0
    %283 = vmatpush1.msra.mxu0 0.0
    %284 = vmatprep.subr.mxu0 0.0
    %285 = vmatpush1.msra.mxu0 0.0
    %286 = vmatprep.subr.mxu0 0.0
    %287 = vmatpush1.msra.mxu0 0.0
    %288 = vmatprep.subr.mxu0 0.0
    %289 = vmatpush1.msra.mxu0 0.0
    %290 = vmatprep.mubr.f32.mxu0 0.0
    %291 = vmatmul.mubr.f32.gmra.mrb[0].mxu0 %v188
    %v292 = vpop.f32.mrb[0].mxu0
    %v293 = vadd.f32 %v224, %v292
    %v294 = vpop.f32.mrb[0].mxu0
    %295 = vmatprep.mubr.f32.mxu0 0.0
    %296 = vmatmul.mubr.f32.gmra.mrb[0].mxu0 %v189
    %v297 = vpop.f32.mrb[0].mxu0
    %v298 = vadd.f32 %v224, %v297
    %v299 = vpop.f32.mrb[0].mxu0
    %300 = vmatprep.mubr.f32.mxu0 0.0
    %301 = vmatmul.mubr.f32.gmra.mrb[0].mxu0 %v190
    %v302 = vpop.f32.mrb[0].mxu0
    %v303 = vadd.f32 %v224, %v302
    %v304 = vpop.f32.mrb[0].mxu0
    %305 = vmatprep.mubr.f32.mxu0 0.0
    %306 = vmatmul.mubr.f32.gmra.mrb[0].mxu0 %v191
    %v307 = vpop.f32.mrb[0].mxu0
    %v308 = vadd.f32 %v224, %v307
    %v309 = vpop.f32.mrb[0].mxu0
    %310 = vmatprep.mubr.f32.mxu0 0.0
    %311 = vmatmul.mubr.f32.gmra.mrb[0].mxu0 %v192
    %v312 = vpop.f32.mrb[0].mxu0
    %v313 = vadd.f32 %v224, %v312
    %v314 = vpop.f32.mrb[0].mxu0
    %315 = vmatprep.mubr.f32.mxu0 0.0
    %316 = vmatmul.mubr.f32.gmra.mrb[0].mxu0 %v193
    %v317 = vpop.f32.mrb[0].mxu0
    %v318 = vadd.f32 %v224, %v317
    %v319 = vpop.f32.mrb[0].mxu0
    %320 = vmatprep.mubr.f32.mxu0 0.0
    %321 = vmatmul.mubr.f32.gmra.mrb[0].mxu0 %v194
    %v322 = vpop.f32.mrb[0].mxu0
    %v323 = vadd.f32 %v224, %v322
    %v324 = vpop.f32.mrb[0].mxu0
    %325 = vmatprep.mubr.f32.mxu0 0.0
    %326 = vmatmul.mubr.f32.gmra.mrb[0].mxu0 %v195
    %v327 = vpop.f32.mrb[0].mxu0
    %v328 = vadd.f32 %v224, %v327
    %v329 = vpop.f32.mrb[0].mxu0
    %330 = vmatprep.mubr.f32.mxu0 0.0
    %331 = vmatmul.mubr.f32.gmra.mrb[0].mxu0 %v196
    %v332 = vpop.f32.mrb[0].mxu0
    %v333 = vadd.f32 %v224, %v332
    %v334 = vpop.f32.mrb[0].mxu0
    %335 = vmatprep.mubr.f32.mxu0 0.0
    %336 = vmatmul.mubr.f32.gmra.mrb[0].mxu0 %v197
    %v337 = vpop.f32.mrb[0].mxu0
    %v338 = vadd.f32 %v224, %v337
    %v339 = vpop.f32.mrb[0].mxu0
    %340 = vmatprep.mubr.f32.mxu0 0.0
    %341 = vmatmul.mubr.f32.gmra.mrb[0].mxu0 %v198
    %v342 = vpop.f32.mrb[0].mxu0
    %v343 = vadd.f32 %v224, %v342
    %v344 = vpop.f32.mrb[0].mxu0
    %345 = vmatprep.mubr.f32.mxu0 0.0
    %346 = vmatmul.mubr.f32.gmra.mrb[0].mxu0 %v199
    %v347 = vpop.f32.mrb[0].mxu0
    %v348 = vadd.f32 %v224, %v347
    %v349 = vpop.f32.mrb[0].mxu0
    %350 = vmatprep.mubr.f32.mxu0 0.0
    %351 = vmatmul.mubr.f32.gmra.mrb[0].mxu0 %v200
    %v352 = vpop.f32.mrb[0].mxu0
    %v353 = vadd.f32 %v224, %v352
    %v354 = vpop.f32.mrb[0].mxu0
    %355 = vmatprep.mubr.f32.mxu0 0.0
    %356 = vmatmul.mubr.f32.gmra.mrb[0].mxu0 %v201
    %v357 = vpop.f32.mrb[0].mxu0
    %v358 = vadd.f32 %v224, %v357
    %v359 = vpop.f32.mrb[0].mxu0
    %360 = vmatprep.mubr.f32.mxu0 0.0
    %361 = vmatmul.mubr.f32.gmra.mrb[0].mxu0 %v202
    %v362 = vpop.f32.mrb[0].mxu0
    %v363 = vadd.f32 %v224, %v362
    %v364 = vpop.f32.mrb[0].mxu0
    %365 = vmatprep.mubr.f32.mxu0 0.0
    %366 = vmatmul.mubr.f32.gmra.mrb[0].mxu0 %v203
    %v367 = vpop.f32.mrb[0].mxu0
    %v368 = vadd.f32 %v224, %v367
    %v369 = vpop.f32.mrb[0].mxu0
    %370 = vmatprep.mubr.f32.mxu0 0.0
    %371 = vmatmul.mubr.f32.gmra.mrb[0].mxu0 %v204
    %v372 = vpop.f32.mrb[0].mxu0
    %v373 = vadd.f32 %v224, %v372
    %v374 = vpop.f32.mrb[0].mxu0
    %375 = vmatprep.mubr.f32.mxu0 0.0
    %376 = vmatmul.mubr.f32.gmra.mrb[0].mxu0 %v205
    %v377 = vpop.f32.mrb[0].mxu0
    %v378 = vadd.f32 %v224, %v377
    %v379 = vpop.f32.mrb[0].mxu0
    %380 = vmatprep.mubr.f32.mxu0 0.0
    %381 = vmatmul.mubr.f32.gmra.mrb[0].mxu0 %v206
    %v382 = vpop.f32.mrb[0].mxu0
    %v383 = vadd.f32 %v224, %v382
    %v384 = vpop.f32.mrb[0].mxu0
    %385 = vmatprep.mubr.f32.mxu0 0.0
    %386 = vmatmul.mubr.f32.gmra.mrb[0].mxu0 %v207
    %v387 = vpop.f32.mrb[0].mxu0
    %v388 = vadd.f32 %v224, %v387
    %v389 = vpop.f32.mrb[0].mxu0
    %390 = vmatprep.mubr.f32.mxu0 0.0
    %391 = vmatmul.mubr.f32.gmra.mrb[0].mxu0 %v208
    %v392 = vpop.f32.mrb[0].mxu0
    %v393 = vadd.f32 %v224, %v392
    %v394 = vpop.f32.mrb[0].mxu0
    %395 = vmatprep.mubr.f32.mxu0 0.0
    %396 = vmatmul.mubr.f32.gmra.mrb[0].mxu0 %v209
    %v397 = vpop.f32.mrb[0].mxu0
    %v398 = vadd.f32 %v224, %v397
    %v399 = vpop.f32.mrb[0].mxu0
    %400 = vmatprep.mubr.f32.mxu0 0.0
    %401 = vmatmul.mubr.f32.gmra.mrb[0].mxu0 %v210
    %v402 = vpop.f32.mrb[0].mxu0
    %v403 = vadd.f32 %v224, %v402
    %v404 = vpop.f32.mrb[0].mxu0
    %405 = vmatprep.mubr.f32.mxu0 0.0
    %406 = vmatmul.mubr.f32.gmra.mrb[0].mxu0 %v211
    %v407 = vpop.f32.mrb[0].mxu0
    %v408 = vadd.f32 %v224, %v407
    %v409 = vpop.f32.mrb[0].mxu0
    %410 = vmatprep.mubr.f32.mxu0 0.0
    %411 = vmatmul.mubr.f32.gmra.mrb[0].mxu0 %v212
    %v412 = vpop.f32.mrb[0].mxu0
    %v413 = vadd.f32 %v224, %v412
    %v414 = vpop.f32.mrb[0].mxu0
    %415 = vmatprep.mubr.f32.mxu0 0.0
    %416 = vmatmul.mubr.f32.gmra.mrb[0].mxu0 %v213
    %v417 = vpop.f32.mrb[0].mxu0
    %v418 = vadd.f32 %v224, %v417
    %v419 = vpop.f32.mrb[0].mxu0
    %420 = vmatprep.mubr.f32.mxu0 0.0
    %421 = vmatmul.mubr.f32.gmra.mrb[0].mxu0 %v214
    %v422 = vpop.f32.mrb[0].mxu0
    %v423 = vadd.f32 %v224, %v422
    %v424 = vpop.f32.mrb[0].mxu0
    %425 = vmatprep.mubr.f32.mxu0 0.0
    %426 = vmatmul.mubr.f32.gmra.mrb[0].mxu0 %v215
    %v427 = vpop.f32.mrb[0].mxu0
    %v428 = vadd.f32 %v224, %v427
    %v429 = vpop.f32.mrb[0].mxu0
    %430 = vmatprep.mubr.f32.mxu0 0.0
    %431 = vmatmul.mubr.f32.gmra.mrb[0].mxu0 %v216
    %v432 = vpop.f32.mrb[0].mxu0
    %v433 = vadd.f32 %v224, %v432
    %v434 = vpop.f32.mrb[0].mxu0
    %435 = vmatprep.mubr.f32.mxu0 0.0
    %436 = vmatmul.mubr.f32.gmra.mrb[0].mxu0 %v217
    %v437 = vpop.f32.mrb[0].mxu0
    %v438 = vadd.f32 %v224, %v437
    %v439 = vpop.f32.mrb[0].mxu0
    %440 = vmatprep.mubr.f32.mxu0 0.0
    %441 = vmatmul.mubr.f32.gmra.mrb[0].mxu0 %v218
    %v442 = vpop.f32.mrb[0].mxu0
    %v443 = vadd.f32 %v224, %v442
    %v444 = vpop.f32.mrb[0].mxu0
    %445 = vmatprep.mubr.f32.mxu0 0.0
    %446 = vmatmul.mubr.f32.gmra.mrb[0].mxu0 %v219
    %v447 = vpop.f32.mrb[0].mxu0
    %v448 = vadd.f32 %v224, %v447
    %v449 = vpop.f32.mrb[0].mxu0
    %450 = vdwg.mxu0
    %v451 = vmax.f32 %v293, 0.0
    %v452 = vmax.f32 %v298, 0.0
    %v453 = vmax.f32 %v303, 0.0
    %v454 = vmax.f32 %v308, 0.0
    %v455 = vmax.f32 %v313, 0.0
    %v456 = vmax.f32 %v318, 0.0
    %v457 = vmax.f32 %v323, 0.0
    %v458 = vmax.f32 %v328, 0.0
    %v459 = vmax.f32 %v333, 0.0
    %v460 = vmax.f32 %v338, 0.0
    %v461 = vmax.f32 %v343, 0.0
    %v462 = vmax.f32 %v348, 0.0
    %v463 = vmax.f32 %v353, 0.0
    %v464 = vmax.f32 %v358, 0.0
    %v465 = vmax.f32 %v363, 0.0
    %v466 = vmax.f32 %v368, 0.0
    %v467 = vmax.f32 %v373, 0.0
    %v468 = vmax.f32 %v378, 0.0
    %v469 = vmax.f32 %v383, 0.0
    %v470 = vmax.f32 %v388, 0.0
    %v471 = vmax.f32 %v393, 0.0
    %v472 = vmax.f32 %v398, 0.0
    %v473 = vmax.f32 %v403, 0.0
    %v474 = vmax.f32 %v408, 0.0
    %v475 = vmax.f32 %v413, 0.0
    %v476 = vmax.f32 %v418, 0.0
    %v477 = vmax.f32 %v423, 0.0
    %v478 = vmax.f32 %v428, 0.0
    %v479 = vmax.f32 %v433, 0.0
    %v480 = vmax.f32 %v438, 0.0
    %v481 = vmax.f32 %v443, 0.0
    %v482 = vmax.f32 %v448, 0.0
    %v485 = vunpack.c.l.s4 1966171168
    %v486 = vunpack.c.0.s8 %v485
    %v487 = vlaneseq
    %v488 = vshrl.u32 %v487, 7
    %v489 = vsub.s32 %v486, %v488
    %v490 = vrot.slane %v170, %v489
    %v491 = vcombine.high %v490, %v490
    %v493 = vunpack.c.l.s4 1966171168
    %v494 = vunpack.c.0.s8 %v493
    %v495 = vlaneseq
    %v496 = vshrl.u32 %v495, 7
    %v497 = vsub.s32 %v494, %v496
    %v498 = vrot.slane %v490, %v497
    %v500 = vunpack.c.l.s4 1966171168
    %v501 = vunpack.c.0.s8 %v500
    %v502 = vlaneseq
    %v503 = vshrl.u32 %v502, 7
    %v504 = vsub.s32 %v501, %v503
    %v505 = vrot.slane %v491, %v504
    %v506 = vlaneseq
    %v507 = vshrl.u32 %v506, 7
    %v508 = vsub.s32 0, %v507
    %v509 = vrot.slane %v498, %v508
    %v510 = vlaneseq
    %v511 = vshrl.u32 %v510, 7
    %v512 = vsub.s32 0, %v511
    %v513 = vrot.slane %v505, %v512
    %v516 = vmul.f32 %v509, %v451
    %v517 = vmul.f32 %v509, %v452
    %v518 = vmul.f32 %v509, %v453
    %v519 = vmul.f32 %v509, %v454
    %v520 = vmul.f32 %v509, %v455
    %v521 = vmul.f32 %v509, %v456
    %v522 = vmul.f32 %v509, %v457
    %v523 = vmul.f32 %v509, %v458
    %v524 = vmul.f32 %v509, %v459
    %v525 = vmul.f32 %v509, %v460
    %v526 = vmul.f32 %v509, %v461
    %v527 = vmul.f32 %v509, %v462
    %v528 = vmul.f32 %v509, %v463
    %v529 = vmul.f32 %v509, %v464
    %v530 = vmul.f32 %v509, %v465
    %v531 = vmul.f32 %v509, %v466
    %v532 = vmul.f32 %v513, %v467
    %v533 = vmul.f32 %v513, %v468
    %v534 = vmul.f32 %v513, %v469
    %v535 = vmul.f32 %v513, %v470
    %v536 = vmul.f32 %v513, %v471
    %v537 = vmul.f32 %v513, %v472
    %v538 = vmul.f32 %v513, %v473
    %v539 = vmul.f32 %v513, %v474
    %v540 = vmul.f32 %v513, %v475
    %v541 = vmul.f32 %v513, %v476
    %v542 = vmul.f32 %v513, %v477
    %v543 = vmul.f32 %v513, %v478
    %v544 = vmul.f32 %v513, %v479
    %v545 = vmul.f32 %v513, %v480
    %v546 = vmul.f32 %v513, %v481
    %v547 = vmul.f32 %v513, %v482
    %548 = vadd.xlane.f32.xlu0 %v516
    %v549 = vpop.xlane.xlu0 %548
    %550 = vadd.xlane.f32.xlu0 %v517
    %v551 = vpop.xlane.xlu0 %550
    %552 = vadd.xlane.f32.xlu0 %v518
    %v553 = vpop.xlane.xlu0 %552
    %554 = vadd.xlane.f32.xlu0 %v519
    %v555 = vpop.xlane.xlu0 %554
    %556 = vadd.xlane.f32.xlu0 %v520
    %v557 = vpop.xlane.xlu0 %556
    %558 = vadd.xlane.f32.xlu0 %v521
    %v559 = vpop.xlane.xlu0 %558
    %560 = vadd.xlane.f32.xlu0 %v522
    %v561 = vpop.xlane.xlu0 %560
    %562 = vadd.xlane.f32.xlu0 %v523
    %v563 = vpop.xlane.xlu0 %562
    %564 = vadd.xlane.f32.xlu0 %v524
    %v565 = vpop.xlane.xlu0 %564
    %566 = vadd.xlane.f32.xlu0 %v525
    %v567 = vpop.xlane.xlu0 %566
    %568 = vadd.xlane.f32.xlu0 %v526
    %v569 = vpop.xlane.xlu0 %568
    %570 = vadd.xlane.f32.xlu0 %v527
    %v571 = vpop.xlane.xlu0 %570
    %572 = vadd.xlane.f32.xlu0 %v528
    %v573 = vpop.xlane.xlu0 %572
    %574 = vadd.xlane.f32.xlu0 %v529
    %v575 = vpop.xlane.xlu0 %574
    %576 = vadd.xlane.f32.xlu0 %v530
    %v577 = vpop.xlane.xlu0 %576
    %578 = vadd.xlane.f32.xlu0 %v531
    %v579 = vpop.xlane.xlu0 %578
    %580 = vadd.xlane.f32.xlu0 %v532
    %v581 = vpop.xlane.xlu0 %580
    %582 = vadd.xlane.f32.xlu0 %v533
    %v583 = vpop.xlane.xlu0 %582
    %584 = vadd.xlane.f32.xlu0 %v534
    %v585 = vpop.xlane.xlu0 %584
    %586 = vadd.xlane.f32.xlu0 %v535
    %v587 = vpop.xlane.xlu0 %586
    %588 = vadd.xlane.f32.xlu0 %v536
    %v589 = vpop.xlane.xlu0 %588
    %590 = vadd.xlane.f32.xlu0 %v537
    %v591 = vpop.xlane.xlu0 %590
    %592 = vadd.xlane.f32.xlu0 %v538
    %v593 = vpop.xlane.xlu0 %592
    %594 = vadd.xlane.f32.xlu0 %v539
    %v595 = vpop.xlane.xlu0 %594
    %596 = vadd.xlane.f32.xlu0 %v540
    %v597 = vpop.xlane.xlu0 %596
    %598 = vadd.xlane.f32.xlu0 %v541
    %v599 = vpop.xlane.xlu0 %598
    %600 = vadd.xlane.f32.xlu0 %v542
    %v601 = vpop.xlane.xlu0 %600
    %602 = vadd.xlane.f32.xlu0 %v543
    %v603 = vpop.xlane.xlu0 %602
    %604 = vadd.xlane.f32.xlu0 %v544
    %v605 = vpop.xlane.xlu0 %604
    %606 = vadd.xlane.f32.xlu0 %v545
    %v607 = vpop.xlane.xlu0 %606
    %608 = vadd.xlane.f32.xlu0 %v546
    %v609 = vpop.xlane.xlu0 %608
    %610 = vadd.xlane.f32.xlu0 %v547
    %v611 = vpop.xlane.xlu0 %610
    %v644 = vlaneseq
    %v645 = vand.u32 %v644, 127
    %v646 = vlaneseq
    %v647 = vshrl.u32 %v646, 7
    %v648 = vsub.s32 %v645, %v647
    %v649 = vrot.slane %v549, %v648
    %v650 = vadd.s32 %v645, 4294967288
    %v651 = vlaneseq
    %v652 = vshrl.u32 %v651, 7
    %v653 = vsub.s32 %v650, %v652
    %v654 = vrot.slane %v551, %v653
    %vm655 = vcmask 130112
    %v656 = vsel %vm655, %v654, %v649
    %v657 = vadd.s32 %v645, 4294967280
    %v658 = vlaneseq
    %v659 = vshrl.u32 %v658, 7
    %v660 = vsub.s32 %v657, %v659
    %v661 = vrot.slane %v553, %v660
    %vm662 = vcmask 195712
    %v663 = vsel %vm662, %v661, %v656
    %v664 = vadd.s32 %v645, 4294967272
    %v665 = vlaneseq
    %v666 = vshrl.u32 %v665, 7
    %v667 = vsub.s32 %v664, %v666
    %v668 = vrot.slane %v555, %v667
    %vm669 = vcmask 261312
    %v670 = vsel %vm669, %v668, %v663
    %v671 = vadd.s32 %v645, 4294967264
    %v672 = vlaneseq
    %v673 = vshrl.u32 %v672, 7
    %v674 = vsub.s32 %v671, %v673
    %v675 = vrot.slane %v557, %v674
    %vm676 = vcmask 326912
    %v677 = vsel %vm676, %v675, %v670
    %v678 = vadd.s32 %v645, 4294967256
    %v679 = vlaneseq
    %v680 = vshrl.u32 %v679, 7
    %v681 = vsub.s32 %v678, %v680
    %v682 = vrot.slane %v559, %v681
    %vm683 = vcmask 392512
    %v684 = vsel %vm683, %v682, %v677
    %v685 = vadd.s32 %v645, 4294967248
    %v686 = vlaneseq
    %v687 = vshrl.u32 %v686, 7
    %v688 = vsub.s32 %v685, %v687
    %v689 = vrot.slane %v561, %v688
    %vm690 = vcmask 458112
    %v691 = vsel %vm690, %v689, %v684
    %v692 = vadd.s32 %v645, 4294967240
    %v693 = vlaneseq
    %v694 = vshrl.u32 %v693, 7
    %v695 = vsub.s32 %v692, %v694
    %v696 = vrot.slane %v563, %v695
    %vm697 = vcmask 523712
    %v698 = vsel %vm697, %v696, %v691
    %v699 = vadd.s32 %v645, 4294967232
    %v700 = vlaneseq
    %v701 = vshrl.u32 %v700, 7
    %v702 = vsub.s32 %v699, %v701
    %v703 = vrot.slane %v565, %v702
    %vm704 = vcmask 589312
    %v705 = vsel %vm704, %v703, %v698
    %v706 = vadd.s32 %v645, 4294967224
    %v707 = vlaneseq
    %v708 = vshrl.u32 %v707, 7
    %v709 = vsub.s32 %v706, %v708
    %v710 = vrot.slane %v567, %v709
    %vm711 = vcmask 654912
    %v712 = vsel %vm711, %v710, %v705
    %v713 = vadd.s32 %v645, 4294967216
    %v714 = vlaneseq
    %v715 = vshrl.u32 %v714, 7
    %v716 = vsub.s32 %v713, %v715
    %v717 = vrot.slane %v569, %v716
    %vm718 = vcmask 720512
    %v719 = vsel %vm718, %v717, %v712
    %v720 = vadd.s32 %v645, 4294967208
    %v721 = vlaneseq
    %v722 = vshrl.u32 %v721, 7
    %v723 = vsub.s32 %v720, %v722
    %v724 = vrot.slane %v571, %v723
    %vm725 = vcmask 786112
    %v726 = vsel %vm725, %v724, %v719
    %v727 = vadd.s32 %v645, 4294967200
    %v728 = vlaneseq
    %v729 = vshrl.u32 %v728, 7
    %v730 = vsub.s32 %v727, %v729
    %v731 = vrot.slane %v573, %v730
    %vm732 = vcmask 851712
    %v733 = vsel %vm732, %v731, %v726
    %v734 = vadd.s32 %v645, 4294967192
    %v735 = vlaneseq
    %v736 = vshrl.u32 %v735, 7
    %v737 = vsub.s32 %v734, %v736
    %v738 = vrot.slane %v575, %v737
    %vm739 = vcmask 917312
    %v740 = vsel %vm739, %v738, %v733
    %v741 = vadd.s32 %v645, 4294967184
    %v742 = vlaneseq
    %v743 = vshrl.u32 %v742, 7
    %v744 = vsub.s32 %v741, %v743
    %v745 = vrot.slane %v577, %v744
    %vm746 = vcmask 982912
    %v747 = vsel %vm746, %v745, %v740
    %v748 = vadd.s32 %v645, 4294967176
    %v749 = vlaneseq
    %v750 = vshrl.u32 %v749, 7
    %v751 = vsub.s32 %v748, %v750
    %v752 = vrot.slane %v579, %v751
    %vm753 = vcmask 1048512
    %v754 = vsel %vm753, %v752, %v747
    %v755 = vlaneseq
    %v756 = vshrl.u32 %v755, 7
    %v757 = vsub.s32 %v645, %v756
    %v758 = vrot.slane %v581, %v757
    %v759 = vlaneseq
    %v760 = vshrl.u32 %v759, 7
    %v761 = vsub.s32 %v650, %v760
    %v762 = vrot.slane %v583, %v761
    %v763 = vsel %vm655, %v762, %v758
    %v764 = vlaneseq
    %v765 = vshrl.u32 %v764, 7
    %v766 = vsub.s32 %v657, %v765
    %v767 = vrot.slane %v585, %v766
    %v768 = vsel %vm662, %v767, %v763
    %v769 = vlaneseq
    %v770 = vshrl.u32 %v769, 7
    %v771 = vsub.s32 %v664, %v770
    %v772 = vrot.slane %v587, %v771
    %v773 = vsel %vm669, %v772, %v768
    %v774 = vlaneseq
    %v775 = vshrl.u32 %v774, 7
    %v776 = vsub.s32 %v671, %v775
    %v777 = vrot.slane %v589, %v776
    %v778 = vsel %vm676, %v777, %v773
    %v779 = vlaneseq
    %v780 = vshrl.u32 %v779, 7
    %v781 = vsub.s32 %v678, %v780
    %v782 = vrot.slane %v591, %v781
    %v783 = vsel %vm683, %v782, %v778
    %v784 = vlaneseq
    %v785 = vshrl.u32 %v784, 7
    %v786 = vsub.s32 %v685, %v785
    %v787 = vrot.slane %v593, %v786
    %v788 = vsel %vm690, %v787, %v783
    %v789 = vlaneseq
    %v790 = vshrl.u32 %v789, 7
    %v791 = vsub.s32 %v692, %v790
    %v792 = vrot.slane %v595, %v791
    %v793 = vsel %vm697, %v792, %v788
    %v794 = vlaneseq
    %v795 = vshrl.u32 %v794, 7
    %v796 = vsub.s32 %v699, %v795
    %v797 = vrot.slane %v597, %v796
    %v798 = vsel %vm704, %v797, %v793
    %v799 = vlaneseq
    %v800 = vshrl.u32 %v799, 7
    %v801 = vsub.s32 %v706, %v800
    %v802 = vrot.slane %v599, %v801
    %v803 = vsel %vm711, %v802, %v798
    %v804 = vlaneseq
    %v805 = vshrl.u32 %v804, 7
    %v806 = vsub.s32 %v713, %v805
    %v807 = vrot.slane %v601, %v806
    %v808 = vsel %vm718, %v807, %v803
    %v809 = vlaneseq
    %v810 = vshrl.u32 %v809, 7
    %v811 = vsub.s32 %v720, %v810
    %v812 = vrot.slane %v603, %v811
    %v813 = vsel %vm725, %v812, %v808
    %v814 = vlaneseq
    %v815 = vshrl.u32 %v814, 7
    %v816 = vsub.s32 %v727, %v815
    %v817 = vrot.slane %v605, %v816
    %v818 = vsel %vm732, %v817, %v813
    %v819 = vlaneseq
    %v820 = vshrl.u32 %v819, 7
    %v821 = vsub.s32 %v734, %v820
    %v822 = vrot.slane %v607, %v821
    %v823 = vsel %vm739, %v822, %v818
    %v824 = vlaneseq
    %v825 = vshrl.u32 %v824, 7
    %v826 = vsub.s32 %v741, %v825
    %v827 = vrot.slane %v609, %v826
    %v828 = vsel %vm746, %v827, %v823
    %v829 = vlaneseq
    %v830 = vshrl.u32 %v829, 7
    %v831 = vsub.s32 %v748, %v830
    %v832 = vrot.slane %v611, %v831
    %v833 = vsel %vm753, %v832, %v828
    %vm834 = vcmask 1041409
    %v835 = vsel %vm834, %v833, %v754
    %837 = vst [vmem:[#allocation2] sm:$0x3] %v835
    %v838 = vld [vmem:[#allocation2] sm:$0x3]
    %vm839 = vcmp.lt.s32.totalorder %v645, 8
    %v840 = vsel %vm839, %v838, -1e+30
    %vm841 = vcmask 1041408
    %v842 = vsel %vm841, %v840, -inf
    %843 = vmax.xlane.f32.xlu0 %v842
    %v844 = vpop.xlane.xlu0 %843
    %v845 = vsub.f32 %v840, %v844
    %v846 = vmul.f32 %v845, 1.442695
    %v847 = vpow.pop %v846
    %v848 = vsel %vm841, %v847, 0.0
    %849 = vadd.xlane.f32.xlu0 %v848
    %v850 = vpop.xlane.xlu0 %849
    %v851 = vrcp.pop %v850
    %v852 = vmul.f32 %v847, %v851
    %853 = vst [vmem:[#allocation12] sm:$0x3] %v852
    %854 = vst [vmem:[#allocation2] sm:$0x3] %v852
    %855 = vst [vmem:[#allocation3] sm:$0x3] 0.0
    %v856 = vld [vmem:[#allocation2] sm:$0x3]
    %v857 = vld [vmem:[#allocation7] sm:$0xff]
    %v858 = vld [vmem:[#allocation7 + $0x8] sm:$0xff]
    %v859 = vld [vmem:[#allocation7 + $0x10] sm:$0xff]
    %v860 = vld [vmem:[#allocation7 + $0x18] sm:$0xff]
    %v861 = vld [vmem:[#allocation7 + $0x20] sm:$0xff]
    %v862 = vld [vmem:[#allocation7 + $0x28] sm:$0xff]
    %v863 = vld [vmem:[#allocation7 + $0x30] sm:$0xff]
    %v864 = vld [vmem:[#allocation7 + $0x38] sm:$0xff]
    %v865 = vld [vmem:[#allocation7 + $0x40] sm:$0xff]
    %v866 = vld [vmem:[#allocation7 + $0x48] sm:$0xff]
    %v867 = vld [vmem:[#allocation7 + $0x50] sm:$0xff]
    %v868 = vld [vmem:[#allocation7 + $0x58] sm:$0xff]
    %v869 = vld [vmem:[#allocation7 + $0x60] sm:$0xff]
    %v870 = vld [vmem:[#allocation7 + $0x68] sm:$0xff]
    %v871 = vld [vmem:[#allocation7 + $0x70] sm:$0xff]
    %v872 = vld [vmem:[#allocation7 + $0x78] sm:$0xff]
    %v873 = vld [vmem:[#allocation7 + $0x80] sm:$0xff]
    %v874 = vld [vmem:[#allocation7 + $0x88] sm:$0xff]
    %v875 = vld [vmem:[#allocation7 + $0x90] sm:$0xff]
    %v876 = vld [vmem:[#allocation7 + $0x98] sm:$0xff]
    %v877 = vld [vmem:[#allocation7 + $0xa0] sm:$0xff]
    %v878 = vld [vmem:[#allocation7 + $0xa8] sm:$0xff]
    %v879 = vld [vmem:[#allocation7 + $0xb0] sm:$0xff]
    %v880 = vld [vmem:[#allocation7 + $0xb8] sm:$0xff]
    %v881 = vld [vmem:[#allocation7 + $0xc0] sm:$0xff]
    %v882 = vld [vmem:[#allocation7 + $0xc8] sm:$0xff]
    %v883 = vld [vmem:[#allocation7 + $0xd0] sm:$0xff]
    %v884 = vld [vmem:[#allocation7 + $0xd8] sm:$0xff]
    %v885 = vld [vmem:[#allocation7 + $0xe0] sm:$0xff]
    %v886 = vld [vmem:[#allocation7 + $0xe8] sm:$0xff]
    %v887 = vld [vmem:[#allocation7 + $0xf0] sm:$0xff]
    %v888 = vld [vmem:[#allocation7 + $0xf8] sm:$0xff]
    %v889 = vld [vmem:[#allocation3] sm:$0x3]
    %v890 = vlaneseq
    %v891 = vshrl.u32 %v890, 7
    %v892 = vsub.s32 0, %v891
    %v893 = vrot.slane %v856, %v892
    %895 = vbcast.lane.b32.xlu0 %v893, 256
    %v896 = vpop.permute.xlu0 %895
    %s898 = sor.u32 256, 8
    %899 = vbcast.lane.b32.xlu0 %v893, %s898
    %v900 = vpop.permute.xlu0 %899
    %s902 = sor.u32 256, 16
    %903 = vbcast.lane.b32.xlu0 %v893, %s902
    %v904 = vpop.permute.xlu0 %903
    %s906 = sor.u32 256, 24
    %907 = vbcast.lane.b32.xlu0 %v893, %s906
    %v908 = vpop.permute.xlu0 %907
    %s910 = sor.u32 256, 32
    %911 = vbcast.lane.b32.xlu0 %v893, %s910
    %v912 = vpop.permute.xlu0 %911
    %s914 = sor.u32 256, 40
    %915 = vbcast.lane.b32.xlu0 %v893, %s914
    %v916 = vpop.permute.xlu0 %915
    %s918 = sor.u32 256, 48
    %919 = vbcast.lane.b32.xlu0 %v893, %s918
    %v920 = vpop.permute.xlu0 %919
    %s922 = sor.u32 256, 56
    %923 = vbcast.lane.b32.xlu0 %v893, %s922
    %v924 = vpop.permute.xlu0 %923
    %s926 = sor.u32 256, 64
    %927 = vbcast.lane.b32.xlu0 %v893, %s926
    %v928 = vpop.permute.xlu0 %927
    %s930 = sor.u32 256, 72
    %931 = vbcast.lane.b32.xlu0 %v893, %s930
    %v932 = vpop.permute.xlu0 %931
    %s934 = sor.u32 256, 80
    %935 = vbcast.lane.b32.xlu0 %v893, %s934
    %v936 = vpop.permute.xlu0 %935
    %s938 = sor.u32 256, 88
    %939 = vbcast.lane.b32.xlu0 %v893, %s938
    %v940 = vpop.permute.xlu0 %939
    %s942 = sor.u32 256, 96
    %943 = vbcast.lane.b32.xlu0 %v893, %s942
    %v944 = vpop.permute.xlu0 %943
    %s946 = sor.u32 256, 104
    %947 = vbcast.lane.b32.xlu0 %v893, %s946
    %v948 = vpop.permute.xlu0 %947
    %s950 = sor.u32 256, 112
    %951 = vbcast.lane.b32.xlu0 %v893, %s950
    %v952 = vpop.permute.xlu0 %951
    %s954 = sor.u32 256, 120
    %955 = vbcast.lane.b32.xlu0 %v893, %s954
    %v956 = vpop.permute.xlu0 %955
    %v957 = vlaneseq
    %v958 = vshrl.u32 %v957, 7
    %v959 = vsub.s32 1, %v958
    %v960 = vrot.slane %v856, %v959
    %962 = vbcast.lane.b32.xlu0 %v960, 256
    %v963 = vpop.permute.xlu0 %962
    %s965 = sor.u32 256, 8
    %966 = vbcast.lane.b32.xlu0 %v960, %s965
    %v967 = vpop.permute.xlu0 %966
    %s969 = sor.u32 256, 16
    %970 = vbcast.lane.b32.xlu0 %v960, %s969
    %v971 = vpop.permute.xlu0 %970
    %s973 = sor.u32 256, 24
    %974 = vbcast.lane.b32.xlu0 %v960, %s973
    %v975 = vpop.permute.xlu0 %974
    %s977 = sor.u32 256, 32
    %978 = vbcast.lane.b32.xlu0 %v960, %s977
    %v979 = vpop.permute.xlu0 %978
    %s981 = sor.u32 256, 40
    %982 = vbcast.lane.b32.xlu0 %v960, %s981
    %v983 = vpop.permute.xlu0 %982
    %s985 = sor.u32 256, 48
    %986 = vbcast.lane.b32.xlu0 %v960, %s985
    %v987 = vpop.permute.xlu0 %986
    %s989 = sor.u32 256, 56
    %990 = vbcast.lane.b32.xlu0 %v960, %s989
    %v991 = vpop.permute.xlu0 %990
    %s993 = sor.u32 256, 64
    %994 = vbcast.lane.b32.xlu0 %v960, %s993
    %v995 = vpop.permute.xlu0 %994
    %s997 = sor.u32 256, 72
    %998 = vbcast.lane.b32.xlu0 %v960, %s997
    %v999 = vpop.permute.xlu0 %998
    %s1001 = sor.u32 256, 80
    %1002 = vbcast.lane.b32.xlu0 %v960, %s1001
    %v1003 = vpop.permute.xlu0 %1002
    %s1005 = sor.u32 256, 88
    %1006 = vbcast.lane.b32.xlu0 %v960, %s1005
    %v1007 = vpop.permute.xlu0 %1006
    %s1009 = sor.u32 256, 96
    %1010 = vbcast.lane.b32.xlu0 %v960, %s1009
    %v1011 = vpop.permute.xlu0 %1010
    %s1013 = sor.u32 256, 104
    %1014 = vbcast.lane.b32.xlu0 %v960, %s1013
    %v1015 = vpop.permute.xlu0 %1014
    %s1017 = sor.u32 256, 112
    %1018 = vbcast.lane.b32.xlu0 %v960, %s1017
    %v1019 = vpop.permute.xlu0 %1018
    %s1021 = sor.u32 256, 120
    %1022 = vbcast.lane.b32.xlu0 %v960, %s1021
    %v1023 = vpop.permute.xlu0 %1022
    %v1024 = vmul.f32 %v896, %v857
    %v1025 = vmul.f32 %v900, %v858
    %v1026 = vmul.f32 %v904, %v859
    %v1027 = vmul.f32 %v908, %v860
    %v1028 = vmul.f32 %v912, %v861
    %v1029 = vmul.f32 %v916, %v862
    %v1030 = vmul.f32 %v920, %v863
    %v1031 = vmul.f32 %v924, %v864
    %v1032 = vmul.f32 %v928, %v865
    %v1033 = vmul.f32 %v932, %v866
    %v1034 = vmul.f32 %v936, %v867
    %v1035 = vmul.f32 %v940, %v868
    %v1036 = vmul.f32 %v944, %v869
    %v1037 = vmul.f32 %v948, %v870
    %v1038 = vmul.f32 %v952, %v871
    %v1039 = vmul.f32 %v956, %v872
    %v1040 = vmul.f32 %v963, %v873
    %v1041 = vmul.f32 %v967, %v874
    %v1042 = vmul.f32 %v971, %v875
    %v1043 = vmul.f32 %v975, %v876
    %v1044 = vmul.f32 %v979, %v877
    %v1045 = vmul.f32 %v983, %v878
    %v1046 = vmul.f32 %v987, %v879
    %v1047 = vmul.f32 %v991, %v880
    %v1048 = vmul.f32 %v995, %v881
    %v1049 = vmul.f32 %v999, %v882
    %v1050 = vmul.f32 %v1003, %v883
    %v1051 = vmul.f32 %v1007, %v884
    %v1052 = vmul.f32 %v1011, %v885
    %v1053 = vmul.f32 %v1015, %v886
    %v1054 = vmul.f32 %v1019, %v887
    %v1055 = vmul.f32 %v1023, %v888
    %v1056 = vadd.f32 %v1024, %v1025
    %v1057 = vadd.f32 %v1056, %v1026
    %v1058 = vadd.f32 %v1057, %v1027
    %v1059 = vadd.f32 %v1058, %v1028
    %v1060 = vadd.f32 %v1059, %v1029
    %v1061 = vadd.f32 %v1060, %v1030
    %v1062 = vadd.f32 %v1061, %v1031
    %v1063 = vadd.f32 %v1062, %v1032
    %v1064 = vadd.f32 %v1063, %v1033
    %v1065 = vadd.f32 %v1064, %v1034
    %v1066 = vadd.f32 %v1065, %v1035
    %v1067 = vadd.f32 %v1066, %v1036
    %v1068 = vadd.f32 %v1067, %v1037
    %v1069 = vadd.f32 %v1068, %v1038
    %v1070 = vadd.f32 %v1069, %v1039
    %v1071 = vrot.slane %v1070, 4
    %v1072 = vadd.f32 %v1070, %v1071
    %v1073 = vrot.slane %v1072, 2
    %v1074 = vadd.f32 %v1072, %v1073
    %v1075 = vrot.slane %v1074, 1
    %v1076 = vadd.f32 %v1074, %v1075
    %v1077 = vadd.f32 %v1040, %v1041
    %v1078 = vadd.f32 %v1077, %v1042
    %v1079 = vadd.f32 %v1078, %v1043
    %v1080 = vadd.f32 %v1079, %v1044
    %v1081 = vadd.f32 %v1080, %v1045
    %v1082 = vadd.f32 %v1081, %v1046
    %v1083 = vadd.f32 %v1082, %v1047
    %v1084 = vadd.f32 %v1083, %v1048
    %v1085 = vadd.f32 %v1084, %v1049
    %v1086 = vadd.f32 %v1085, %v1050
    %v1087 = vadd.f32 %v1086, %v1051
    %v1088 = vadd.f32 %v1087, %v1052
    %v1089 = vadd.f32 %v1088, %v1053
    %v1090 = vadd.f32 %v1089, %v1054
    %v1091 = vadd.f32 %v1090, %v1055
    %v1092 = vrot.slane %v1091, 4
    %v1093 = vadd.f32 %v1091, %v1092
    %v1094 = vrot.slane %v1093, 2
    %v1095 = vadd.f32 %v1093, %v1094
    %v1096 = vrot.slane %v1095, 1
    %v1097 = vadd.f32 %v1095, %v1096
    %v1100 = vsel %vm834, %v1097, %v1076
    %v1102 = vadd.f32 %v889, %v1100
    %1103 = vst [vmem:[#allocation3] sm:$0x3] %v1102
    %v1104 = vld [vmem:[#allocation3] sm:$0x3]
    %1105 = vst [vmem:[#allocation13] sm:$0x3] %v1104
    // Predicated region
    $region42: #{tpu_custom_call.1} parent=1 // pred_check
      _
    $region43: #{tpu_custom_call.1} parent=1 // pred_check_branch
      %1107 = sbr.rel (0) target = $region45
    $region44: #{tpu_custom_call.1} parent=1 // pred_region
      %s1109 = ssub.s32 32, 32
      %1110 = vsyncadd [#allocation6], %s1109
      %s1112 = sshll.u32 [#allocation12], 4
      %s1113 = int_to_ptr.vmem [resolvable:$true] %s1112
      %1115 = dma.vmem_to_hbm [thread:$0]  %s1113, 32, %s6, [#allocation6]
    $region45: #{tpu_custom_call.1} parent=1 // pred_fallthru
      _
    // Predicated region
    $region46: #{tpu_custom_call.1} parent=1 // pred_check
      _
    $region47: #{tpu_custom_call.1} parent=1 // pred_check_branch
      %1117 = sbr.rel (0) target = $region49
    $region48: #{tpu_custom_call.1} parent=1 // pred_region
      %s1119 = ssub.s32 32, 32
      %1120 = vsyncadd [#allocation14], %s1119
      %s1122 = sshll.u32 [#allocation13], 4
      %s1123 = int_to_ptr.vmem [resolvable:$true] %s1122
      %1125 = dma.vmem_to_hbm [thread:$0]  %s1123, 32, %s7, [#allocation14]
    $region49: #{tpu_custom_call.1} parent=1 // pred_fallthru
      _
    // Predicated region
    $region50: #{tpu_custom_call.1} parent=1 // pred_check
      _
    $region51: #{tpu_custom_call.1} parent=1 // pred_check_branch
      %1127 = sbr.rel (0) target = $region53
    $region52: #{tpu_custom_call.1} parent=1 // pred_region
      %1128 = dma.done [#allocation6], 32
    $region53: #{tpu_custom_call.1} parent=1 // pred_fallthru
      _
    // Predicated region
    $region54: #{tpu_custom_call.1} parent=1 // pred_check
      _
    $region55: #{tpu_custom_call.1} parent=1 // pred_check_branch
      %1130 = sbr.rel (0) target = $region57
    $region56: #{tpu_custom_call.1} parent=1 // pred_region
      %1131 = dma.done [#allocation14], 32
    $region57: #{tpu_custom_call.1} parent=1 // pred_fallthru
      _
    %1132 = vsyncpa [#allocation5], 1
    %1133 = vsyncpa [#allocation8], 1
    %1134 = vsyncpa [#allocation11], 1
    %1135 = vsyncpa [#allocation6], 1
    %1136 = vsyncpa [#allocation14], 1

</llo_original>
